<compile_context>
chip_gen: v5e
topology: v5e:2x2
jax: 0.10.0
libtpu: 0.0.40
codegen_flags: <defaults>
</compile_context>

<pallas_src>
import jax
import jax.numpy as jnp
from jax.experimental import pallas as pl
from jax.experimental.pallas import tpu as pltpu


def _h_swish_kernel(x_ref, o_ref):
    x = x_ref[...]
    # h_swish(x) = x * relu6(x + 3) / 6 = x * clip(x + 3, 0, 6) * (1/6)
    hs = jnp.clip(x + 3.0, 0.0, 6.0) * (1.0 / 6.0)
    o_ref[...] = (x * hs).astype(o_ref.dtype)


_LANE_CANDIDATES = (1024, 512, 256, 128)


def _sublane_multiple(dtype) -> int:
    # f32 -> 8, bf16 -> 16, int8/fp8 -> 32 (sub-32-bit dtypes pack sublanes).
    return max(8, 32 // jnp.dtype(dtype).itemsize)


def h_swish(x: jax.Array, *, target_block_bytes: int = 2 * 1024 * 1024) -> jax.Array:
    """Hard-swish, elementwise, any shape. Matches torch h_swish forward."""
    orig_shape = x.shape
    dtype = x.dtype
    itemsize = jnp.dtype(dtype).itemsize

    n = x.size
    if n == 0:
        return x

    # Flat length rounded up to a multiple of 128 lanes (no-op for typical
    # conv feature maps, which already are).
    n_pad = -(-n // 128) * 128
    pad = n_pad - n

    # Lane-dense 2D view: widest last dim (multiple of 128) that divides the
    # flat length, so stores are unmasked full-width vst.
    lanes = next(c for c in _LANE_CANDIDATES if n_pad % c == 0)
    rows = n_pad // lanes

    if pad:
        # Rare fallback (flat size not a multiple of 128). h_swish(0) == 0,
        # so zero padding is benign.
        flat = jnp.concatenate([x.reshape(-1), jnp.zeros((pad,), dtype=dtype)])
        x2d = flat.reshape(rows, lanes)
    else:
        x2d = x.reshape(rows, lanes)

    # Tile rows: ~target_block_bytes per block, aligned to the dtype's
    # sublane packing. Small inputs take the whole array as one block
    # (block dim == full array dim is always legal).
    sub = _sublane_multiple(dtype)
    tr_target = max(sub, (target_block_bytes // (lanes * itemsize)) // sub * sub)
    tr = rows if rows <= tr_target else tr_target

    grid = (pl.cdiv(rows, tr),)  # ragged last block is masked by Pallas

    out2d = pl.pallas_call(
        _h_swish_kernel,
        out_shape=jax.ShapeDtypeStruct((rows, lanes), dtype),
        grid_spec=pltpu.PrefetchScalarGridSpec(
            num_scalar_prefetch=0,
            grid=grid,
            in_specs=[pl.BlockSpec((tr, lanes), lambda i: (i, 0))],
            out_specs=pl.BlockSpec((tr, lanes), lambda i: (i, 0)),
        ),
        compiler_params=pltpu.CompilerParams(
            dimension_semantics=("parallel",),
        ),
    )(x2d)

    if pad:
        return out2d.reshape(-1)[:n].reshape(orig_shape)
    return out2d.reshape(orig_shape)


def _ref_h_swish(x):
    return x * jnp.clip(x + 3.0, 0.0, 6.0) / 6.0


if __name__ == "__main__":
    key = jax.random.PRNGKey(0)

    # Primary check: NCHW feature map, no-padding fast path, single block.
    x = jax.random.normal(key, (2, 4, 16, 16), dtype=jnp.float32) * 4.0
    y = jax.block_until_ready(h_swish(x))
    assert y.shape == x.shape and y.dtype == x.dtype
    assert jnp.allclose(y, _ref_h_swish(x), atol=1e-6), "mismatch vs reference"

    # Secondary check: odd size (pad fallback) + multi-block grid with a
    # ragged last block (tiny target_block_bytes forces tr < rows).
    x2 = jax.random.normal(key, (2, 3, 33, 33), dtype=jnp.float32) * 4.0
    y2 = jax.block_until_ready(h_swish(x2, target_block_bytes=8 * 1024))
    assert y2.shape == x2.shape and y2.dtype == x2.dtype
    assert jnp.allclose(y2, _ref_h_swish(x2), atol=1e-6), "mismatch vs reference (ragged)"

    print("KERNEL_OK")
</pallas_src>

<mosaic_0001>
module attributes {stable_mosaic.version = 11 : i64} {
  func.func @_h_swish_kernel(%arg0: i32, %arg1: memref<2x1024xf32, #tpu.memory_space<vmem>>, %arg2: memref<2x1024xf32, #tpu.memory_space<vmem>>) attributes {dimension_semantics = [#tpu.dimension_semantics<parallel>], iteration_bounds = array<i64: 1>, scalar_prefetch = 0 : i64, scratch_operands = 0 : i64, tpu.core_type = #tpu.core_type<tc>, window_params = [{transform_indices = @transform_0, window_bounds = array<i64: 2, 1024>}, {transform_indices = @transform_1, window_bounds = array<i64: 2, 1024>}]} {
    %c0 = arith.constant 0 : index
    %c0_0 = arith.constant 0 : index
    %0 = vector.load %arg1[%c0, %c0_0] : memref<2x1024xf32, #tpu.memory_space<vmem>>, vector<2x1024xf32>
    %cst = arith.constant 3.000000e+00 : f32
    %1 = vector.broadcast %cst : f32 to vector<2x1024xf32>
    %2 = arith.addf %0, %1 : vector<2x1024xf32>
    %cst_1 = arith.constant 0.000000e+00 : f32
    %cst_2 = arith.constant 6.000000e+00 : f32
    %3 = vector.broadcast %cst_1 : f32 to vector<2x1024xf32>
    %4 = arith.maximumf %3, %2 : vector<2x1024xf32>
    %5 = vector.broadcast %cst_2 : f32 to vector<2x1024xf32>
    %6 = arith.minimumf %5, %4 : vector<2x1024xf32>
    %cst_3 = arith.constant 0.166666672 : f32
    %7 = vector.broadcast %cst_3 : f32 to vector<2x1024xf32>
    %8 = arith.mulf %6, %7 : vector<2x1024xf32>
    %9 = arith.mulf %0, %8 : vector<2x1024xf32>
    %c0_4 = arith.constant 0 : index
    %c0_5 = arith.constant 0 : index
    %10 = vector.load %arg2[%c0_4, %c0_5] : memref<2x1024xf32, #tpu.memory_space<vmem>>, vector<2x1024xf32>
    tpu.vector_store %arg2[%c0_4, %c0_5], %9 {strides = array<i32>} : memref<2x1024xf32, #tpu.memory_space<vmem>>, vector<2x1024xf32>,
    return
  }
  func.func @transform_0(%arg0: i32) -> (i32, i32) {
    %c0_i32 = arith.constant 0 : i32
    %c0_i32_0 = arith.constant 0 : i32
    return %arg0, %c0_i32 : i32, i32
  }
  func.func @transform_1(%arg0: i32) -> (i32, i32) {
    %c0_i32 = arith.constant 0 : i32
    %c0_i32_0 = arith.constant 0 : i32
    return %arg0, %c0_i32 : i32, i32
  }
}

</mosaic_0001>

<llo_original>
// kernel: tpu_custom_call.1
$region0: #{tpu_custom_call.1}
  #allocation0 [shape = 'u32[]', space=smem, size = 0x4, offset = 0x4, fixed_abs, tag = 'smem constant byte address 0x4 - core index']
  #allocation1 [shape = 'u32[72,128]{1,0:T(1,128)}', space=vmem, size = 0x9000, scoped, tag = 'internal scratch']
  %s0 = inlined_call_operand.hbm [shape: f32[2,1024], index: 0, kind: input, shape index: {}]
  %s1 = inlined_call_operand.hbm [shape: f32[2,1024], index: 1, kind: output, shape index: {}]
  %s2 = sld [smem:[#allocation0]]
  $region18: #{tpu_custom_call.1} parent=0
    _
  %s4 = ssub.s32 1, %s2
  %s5 = scalar_select 0, %s4, %s2
  $region1: #{tpu_custom_call.1} parent=0
    #allocation2 [shape = 'u8[8192]{0}', space=vmem, size = 0x2000, scoped, tag = 'input window, operand 0, single buffered']
    #allocation3 [shape = 's32[1]{0}', space=sflag, size = 0x4, scoped, tag = 'scoped memory for tpu_custom_call.1']
    #allocation4 [shape = 's32[1]{0}', space=sflag, size = 0x4, scoped, tag = 'scoped memory for tpu_custom_call.1']
    #allocation5 [shape = 'u8[8192]{0}', space=vmem, size = 0x2000, scoped, tag = 'output window, operand 0, single buffered']
    %6 = vsyncpa [#allocation3], 0
    %7 = vsyncpa [#allocation4], 0
    // Predicated region
    $region2: #{tpu_custom_call.1} parent=1 // pred_check
      _
    $region3: #{tpu_custom_call.1} parent=1 // pred_check_branch
      %9 = sbr.rel (0) target = $region5
    $region4: #{tpu_custom_call.1} parent=1 // pred_region
      %11 = vsyncadd [#allocation3], 0
      %s13 = sshll.u32 %s0, 4
      %s14 = int_to_ptr.hbm [resolvable:$true] %s13
      %s15 = sshll.u32 [#allocation2], 4
      %s16 = int_to_ptr.vmem [resolvable:$true] %s15
      %18 = dma.hbm_to_vmem [thread:$0]  %s14, 256, %s16, [#allocation3]
    $region5: #{tpu_custom_call.1} parent=1 // pred_fallthru
      _
    // Predicated region
    $region6: #{tpu_custom_call.1} parent=1 // pred_check
      _
    $region7: #{tpu_custom_call.1} parent=1 // pred_check_branch
      %20 = sbr.rel (0) target = $region9
    $region8: #{tpu_custom_call.1} parent=1 // pred_region
      %22 = dma.done [#allocation3], 256
    $region9: #{tpu_custom_call.1} parent=1 // pred_fallthru
      _
    %v23 = vld [vmem:[#allocation2] sm:$0xff]
    %v24 = vld [vmem:[#allocation2 + $0x8] sm:$0xff]
    %v25 = vadd.f32 %v23, 3.0
    %v26 = vadd.f32 %v24, 3.0
    %v27 = vmax.f32 %v25, 0.0
    %v28 = vmax.f32 %v26, 0.0
    %v29 = vmin.f32 %v27, 6.0
    %v30 = vmin.f32 %v28, 6.0
    %v31 = vmul.f32 %v29, 0.16666667
    %v32 = vmul.f32 %v30, 0.16666667
    %v33 = vmul.f32 %v23, %v31
    %v34 = vmul.f32 %v24, %v32
    %35 = vst [vmem:[#allocation5] sm:$0xff] %v33
    %36 = vst [vmem:[#allocation5 + $0x8] sm:$0xff] %v34
    // Predicated region
    $region10: #{tpu_custom_call.1} parent=1 // pred_check
      _
    $region11: #{tpu_custom_call.1} parent=1 // pred_check_branch
      %38 = sbr.rel (0) target = $region13
    $region12: #{tpu_custom_call.1} parent=1 // pred_region
      %40 = vsyncadd [#allocation4], 0
      %s42 = sshll.u32 [#allocation5], 4
      %s43 = int_to_ptr.vmem [resolvable:$true] %s42
      %s44 = sshll.u32 %s1, 4
      %s45 = int_to_ptr.hbm [resolvable:$true] %s44
      %47 = dma.vmem_to_hbm [thread:$0]  %s43, 256, %s45, [#allocation4]
    $region13: #{tpu_custom_call.1} parent=1 // pred_fallthru
      _
    // Predicated region
    $region14: #{tpu_custom_call.1} parent=1 // pred_check
      _
    $region15: #{tpu_custom_call.1} parent=1 // pred_check_branch
      %49 = sbr.rel (0) target = $region17
    $region16: #{tpu_custom_call.1} parent=1 // pred_region
      %51 = dma.done [#allocation4], 256
    $region17: #{tpu_custom_call.1} parent=1 // pred_fallthru
      _
    %52 = vsyncpa [#allocation3], 1
    %53 = vsyncpa [#allocation4], 1

</llo_original>
